<compile_context>
chip_gen: v7x
topology: tpu7x:2x2x1
jax: 0.10.0
libtpu: 0.0.40
codegen_flags: <defaults>
</compile_context>

<pallas_src>
import math

import jax
import jax.numpy as jnp
from jax.experimental import pallas as pl
from jax.experimental.pallas import tpu as pltpu


# ----------------------------------------------------------------------------
# Kernel
# ----------------------------------------------------------------------------
def eag_kernel(g_ref, x_ref, wg_ref, wx_ref, bg_ref, bx_ref, wpsi_ref,
               bpsi_ref, o_ref):
    # g_ref:    (1, F_g, T)   gating-feature tile    (channels x lanes)
    # x_ref:    (1, F_l, T)   skip-feature tile
    # wg_ref:   (F_int, F_g)  BN-folded block-diagonal grouped conv weights
    # wx_ref:   (F_int, F_l)
    # bg_ref:   (F_int, 1)    BN-folded biases
    # bx_ref:   (F_int, 1)
    # wpsi_ref: (1, F_int)    BN-folded psi conv weights
    # bpsi_ref: (1, 1)        BN-folded psi bias (SMEM scalar)
    # o_ref:    (1, F_l, T)
    g = g_ref[0]                                   # (F_g, T)
    x = x_ref[0]                                   # (F_l, T)

    g1 = jnp.dot(wg_ref[...], g, preferred_element_type=jnp.float32)
    g1 = jnp.maximum(g1 + bg_ref[...], 0.0)        # (F_int, T)

    x1 = jnp.dot(wx_ref[...], x, preferred_element_type=jnp.float32)
    x1 = jnp.maximum(x1 + bx_ref[...], 0.0)        # (F_int, T)

    s = jnp.maximum(x1 + g1, 0.0)                  # (F_int, T)

    psi = jnp.dot(wpsi_ref[...], s, preferred_element_type=jnp.float32)
    psi = jax.nn.sigmoid(psi + bpsi_ref[0, 0])     # (1, T)

    # out = x * psi + x  ==  x * (1 + psi)
    o_ref[0] = (x.astype(jnp.float32) * (1.0 + psi)).astype(o_ref.dtype)


# ----------------------------------------------------------------------------
# Host-side parameter preparation (BN folding, grouped-conv expansion)
# ----------------------------------------------------------------------------
def _fold_bn(w, b, gamma, beta, mean, var, eps):
    """Fold eval-mode BatchNorm into a 1x1 conv: W' = s*W, b' = s*(b-mean)+beta."""
    scale = gamma / jnp.sqrt(var + eps)                       # (C_out,)
    return (w * scale[:, None]).astype(jnp.float32), \
           (scale * (b - mean) + beta).astype(jnp.float32)


def _expand_grouped(w, c_in, groups):
    """(C_out, C_in/groups) grouped 1x1 conv -> block-diagonal (C_out, C_in)."""
    c_out, c_in_pg = w.shape
    c_out_pg = c_out // groups
    full = jnp.zeros((c_out, c_in), dtype=jnp.float32)
    for gi in range(groups):
        full = full.at[gi * c_out_pg:(gi + 1) * c_out_pg,
                       gi * c_in_pg:(gi + 1) * c_in_pg].set(
            w[gi * c_out_pg:(gi + 1) * c_out_pg])
    return full


# ----------------------------------------------------------------------------
# Wrapper
# ----------------------------------------------------------------------------
def efficient_attention_gate(g, x, params, num_groups, *, hw_tile=None,
                             eps=1e-5):
    """g: (B, F_g, H, W), x: (B, F_l, H, W).  Returns (B, F_l, H, W)."""
    B, F_g, H, W = g.shape
    _, F_l, _, _ = x.shape
    F_int = params["wg"].shape[0]
    HW = H * W

    # Fold BN into the 1x1 convs and pre-orient/expand the weights host-side.
    wg, bg = _fold_bn(params["wg"], params["bg"], params["gamma_g"],
                      params["beta_g"], params["mean_g"], params["var_g"], eps)
    wx, bx = _fold_bn(params["wx"], params["bx"], params["gamma_x"],
                      params["beta_x"], params["mean_x"], params["var_x"], eps)
    wg_full = _expand_grouped(wg, F_g, num_groups)            # (F_int, F_g)
    wx_full = _expand_grouped(wx, F_l, num_groups)            # (F_int, F_l)
    bg_col = bg.reshape(F_int, 1)
    bx_col = bx.reshape(F_int, 1)

    scale_p = params["gamma_p"] / jnp.sqrt(params["var_p"] + eps)
    wpsi = (params["wpsi"] * scale_p).reshape(1, F_int).astype(jnp.float32)
    bpsi = (scale_p * (params["bpsi"] - params["mean_p"]) + params["beta_p"])
    bpsi = jnp.asarray(bpsi, dtype=jnp.float32).reshape(1, 1)

    # Lane-dense spatial tiling (multiple of 128).
    if hw_tile is None:
        hw_tile = min(4096, pl.cdiv(HW, 128) * 128)
    hw_tile = pl.cdiv(hw_tile, 128) * 128
    n_hw = pl.cdiv(HW, hw_tile)
    hw_pad = n_hw * hw_tile

    g_flat = g.reshape(B, F_g, HW)
    x_flat = x.reshape(B, F_l, HW)
    if hw_pad != HW:
        pad = ((0, 0), (0, 0), (0, hw_pad - HW))
        g_flat = jnp.pad(g_flat, pad)
        x_flat = jnp.pad(x_flat, pad)

    cost = pl.CostEstimate(
        flops=2 * B * hw_pad * (F_int * F_g + F_int * F_l + F_int)
              + 4 * B * F_l * hw_pad,
        transcendentals=B * hw_pad,
        bytes_accessed=4 * (B * F_g * hw_pad + 2 * B * F_l * hw_pad),
    )

    out = pl.pallas_call(
        eag_kernel,
        out_shape=jax.ShapeDtypeStruct((B, F_l, hw_pad), x.dtype),
        grid_spec=pltpu.PrefetchScalarGridSpec(
            num_scalar_prefetch=0,
            grid=(B, n_hw),
            in_specs=[
                pl.BlockSpec((1, F_g, hw_tile), lambda b, t: (b, 0, t)),
                pl.BlockSpec((1, F_l, hw_tile), lambda b, t: (b, 0, t)),
                pl.BlockSpec((F_int, F_g), lambda b, t: (0, 0)),
                pl.BlockSpec((F_int, F_l), lambda b, t: (0, 0)),
                pl.BlockSpec((F_int, 1), lambda b, t: (0, 0)),
                pl.BlockSpec((F_int, 1), lambda b, t: (0, 0)),
                pl.BlockSpec((1, F_int), lambda b, t: (0, 0)),
                pl.BlockSpec(memory_space=pltpu.MemorySpace.SMEM),
            ],
            out_specs=pl.BlockSpec((1, F_l, hw_tile), lambda b, t: (b, 0, t)),
        ),
        compiler_params=pltpu.CompilerParams(
            dimension_semantics=("parallel", "parallel"),
            vmem_limit_bytes=32 * 1024 * 1024,
        ),
        cost_estimate=cost,
    )(g_flat, x_flat, wg_full, wx_full, bg_col, bx_col, wpsi, bpsi)

    return out[:, :, :HW].reshape(B, F_l, H, W)


# ----------------------------------------------------------------------------
# Pure-JAX reference (explicit grouped conv + BN, mirrors the PyTorch forward)
# ----------------------------------------------------------------------------
def eag_reference(g, x, params, num_groups, eps=1e-5):
    def grouped_conv_bn_relu(inp, w, b, gamma, beta, mean, var):
        B, c_in, H, W = inp.shape
        c_out, c_in_pg = w.shape
        G = num_groups
        inp_g = inp.reshape(B, G, c_in // G, H, W)
        w_g = w.reshape(G, c_out // G, c_in_pg)
        out = jnp.einsum("bgihw,goi->bgohw", inp_g, w_g).reshape(B, c_out, H, W)
        out = out + b[None, :, None, None]
        out = (out - mean[None, :, None, None]) / jnp.sqrt(
            var[None, :, None, None] + eps)
        out = gamma[None, :, None, None] * out + beta[None, :, None, None]
        return jnp.maximum(out, 0.0)

    g1 = grouped_conv_bn_relu(g, params["wg"], params["bg"], params["gamma_g"],
                              params["beta_g"], params["mean_g"], params["var_g"])
    x1 = grouped_conv_bn_relu(x, params["wx"], params["bx"], params["gamma_x"],
                              params["beta_x"], params["mean_x"], params["var_x"])
    s = jnp.maximum(x1 + g1, 0.0)
    psi = jnp.einsum("bchw,c->bhw", s, params["wpsi"]) + params["bpsi"]
    psi = (psi - params["mean_p"]) / jnp.sqrt(params["var_p"] + eps)
    psi = params["gamma_p"] * psi + params["beta_p"]
    psi = jax.nn.sigmoid(psi)[:, None, :, :]
    return x * psi + x


# ----------------------------------------------------------------------------
# Demo / correctness check
# ----------------------------------------------------------------------------
if __name__ == "__main__":
    key = jax.random.PRNGKey(0)
    keys = jax.random.split(key, 16)

    B, F_g, F_l, F_int = 2, 32, 32, 32
    num_groups = 8
    H = W = 16

    def uniform(k, shape, bound):
        return jax.random.uniform(k, shape, jnp.float32, -bound, bound)

    fan_g = F_g // num_groups
    fan_x = F_l // num_groups
    params = dict(
        wg=uniform(keys[0], (F_int, F_g // num_groups), 1.0 / math.sqrt(fan_g)),
        bg=uniform(keys[1], (F_int,), 1.0 / math.sqrt(fan_g)),
        gamma_g=1.0 + 0.1 * jax.random.normal(keys[2], (F_int,)),
        beta_g=0.1 * jax.random.normal(keys[3], (F_int,)),
        mean_g=0.1 * jax.random.normal(keys[4], (F_int,)),
        var_g=jax.random.uniform(keys[5], (F_int,), jnp.float32, 0.5, 1.5),
        wx=uniform(keys[6], (F_int, F_l // num_groups), 1.0 / math.sqrt(fan_x)),
        bx=uniform(keys[7], (F_int,), 1.0 / math.sqrt(fan_x)),
        gamma_x=1.0 + 0.1 * jax.random.normal(keys[8], (F_int,)),
        beta_x=0.1 * jax.random.normal(keys[9], (F_int,)),
        mean_x=0.1 * jax.random.normal(keys[10], (F_int,)),
        var_x=jax.random.uniform(keys[11], (F_int,), jnp.float32, 0.5, 1.5),
        wpsi=uniform(keys[12], (F_int,), 1.0 / math.sqrt(F_int)),
        bpsi=jnp.float32(0.05),
        gamma_p=jnp.float32(1.1),
        beta_p=jnp.float32(-0.05),
        mean_p=jnp.float32(0.02),
        var_p=jnp.float32(0.9),
    )

    g = jax.random.normal(keys[13], (B, F_g, H, W), dtype=jnp.float32)
    x = jax.random.normal(keys[14], (B, F_l, H, W), dtype=jnp.float32)

    # hw_tile=128 -> grid=(B, 2): exercises the spatial tiling at small shapes.
    out = efficient_attention_gate(g, x, params, num_groups, hw_tile=128)
    out = jax.block_until_ready(out)

    ref = eag_reference(g, x, params, num_groups)
    assert out.shape == (B, F_l, H, W)
    assert jnp.allclose(out, ref, atol=1e-4, rtol=1e-4), \
        float(jnp.max(jnp.abs(out - ref)))

    print("KERNEL_OK")
</pallas_src>

<mosaic_0001>
module attributes {stable_mosaic.version = 11 : i64} {
  func.func @eag_kernel(%arg0: i32, %arg1: i32, %arg2: memref<1x32x128xf32, #tpu.memory_space<vmem>>, %arg3: memref<1x32x128xf32, #tpu.memory_space<vmem>>, %arg4: memref<32x32xf32, #tpu.memory_space<vmem>>, %arg5: memref<32x32xf32, #tpu.memory_space<vmem>>, %arg6: memref<32x1xf32, #tpu.memory_space<vmem>>, %arg7: memref<32x1xf32, #tpu.memory_space<vmem>>, %arg8: memref<1x32xf32, #tpu.memory_space<vmem>>, %arg9: memref<1x1xf32, #tpu.memory_space<smem>>, %arg10: memref<1x32x128xf32, #tpu.memory_space<vmem>>) attributes {dimension_semantics = [#tpu.dimension_semantics<parallel>, #tpu.dimension_semantics<parallel>], iteration_bounds = array<i64: 2, 2>, scalar_prefetch = 0 : i64, scratch_operands = 0 : i64, tpu.core_type = #tpu.core_type<tc>, window_params = [{transform_indices = @transform_0, window_bounds = array<i64: 1, 32, 128>}, {transform_indices = @transform_1, window_bounds = array<i64: 1, 32, 128>}, {pipeline_mode = #tpu.pipeline_mode<synchronous>, transform_indices = @transform_2, window_bounds = array<i64: 32, 32>}, {pipeline_mode = #tpu.pipeline_mode<synchronous>, transform_indices = @transform_3, window_bounds = array<i64: 32, 32>}, {pipeline_mode = #tpu.pipeline_mode<synchronous>, transform_indices = @transform_4, window_bounds = array<i64: 32, 1>}, {pipeline_mode = #tpu.pipeline_mode<synchronous>, transform_indices = @transform_5, window_bounds = array<i64: 32, 1>}, {pipeline_mode = #tpu.pipeline_mode<synchronous>, transform_indices = @transform_6, window_bounds = array<i64: 1, 32>}, {transform_indices = @transform_7, window_bounds = array<i64: 1, 1>}, {transform_indices = @transform_8, window_bounds = array<i64: 1, 32, 128>}]} {
    %c0 = arith.constant 0 : index
    %c0_0 = arith.constant 0 : index
    %c0_1 = arith.constant 0 : index
    %0 = vector.load %arg2[%c0, %c0_0, %c0_1] : memref<1x32x128xf32, #tpu.memory_space<vmem>>, vector<1x32x128xf32>
    %1 = vector.shape_cast %0 : vector<1x32x128xf32> to vector<32x128xf32>
    %c0_2 = arith.constant 0 : index
    %c0_3 = arith.constant 0 : index
    %c0_4 = arith.constant 0 : index
    %2 = vector.load %arg3[%c0_2, %c0_3, %c0_4] : memref<1x32x128xf32, #tpu.memory_space<vmem>>, vector<1x32x128xf32>
    %3 = vector.shape_cast %2 : vector<1x32x128xf32> to vector<32x128xf32>
    %c0_5 = arith.constant 0 : index
    %c0_6 = arith.constant 0 : index
    %4 = vector.load %arg4[%c0_5, %c0_6] : memref<32x32xf32, #tpu.memory_space<vmem>>, vector<32x32xf32>
    %cst = arith.constant dense<0.000000e+00> : vector<32x128xf32>
    %5 = tpu.matmul %4, %1, %cst {dimension_numbers = #tpu.dot_dimension_numbers<[1], [0], [0], [1], [0, 0, 1, 1], [], []>} : vector<32x32xf32>, vector<32x128xf32>, vector<32x128xf32> -> vector<32x128xf32>
    %c0_7 = arith.constant 0 : index
    %c0_8 = arith.constant 0 : index
    %6 = vector.load %arg6[%c0_7, %c0_8] : memref<32x1xf32, #tpu.memory_space<vmem>>, vector<32x1xf32>
    %7 = vector.broadcast %6 : vector<32x1xf32> to vector<32x128xf32>
    %8 = arith.addf %5, %7 : vector<32x128xf32>
    %cst_9 = arith.constant 0.000000e+00 : f32
    %9 = vector.broadcast %cst_9 : f32 to vector<32x128xf32>
    %10 = arith.maximumf %8, %9 : vector<32x128xf32>
    %c0_10 = arith.constant 0 : index
    %c0_11 = arith.constant 0 : index
    %11 = vector.load %arg5[%c0_10, %c0_11] : memref<32x32xf32, #tpu.memory_space<vmem>>, vector<32x32xf32>
    %cst_12 = arith.constant dense<0.000000e+00> : vector<32x128xf32>
    %12 = tpu.matmul %11, %3, %cst_12 {dimension_numbers = #tpu.dot_dimension_numbers<[1], [0], [0], [1], [0, 0, 1, 1], [], []>} : vector<32x32xf32>, vector<32x128xf32>, vector<32x128xf32> -> vector<32x128xf32>
    %c0_13 = arith.constant 0 : index
    %c0_14 = arith.constant 0 : index
    %13 = vector.load %arg7[%c0_13, %c0_14] : memref<32x1xf32, #tpu.memory_space<vmem>>, vector<32x1xf32>
    %14 = vector.broadcast %13 : vector<32x1xf32> to vector<32x128xf32>
    %15 = arith.addf %12, %14 : vector<32x128xf32>
    %cst_15 = arith.constant 0.000000e+00 : f32
    %16 = vector.broadcast %cst_15 : f32 to vector<32x128xf32>
    %17 = arith.maximumf %15, %16 : vector<32x128xf32>
    %18 = arith.addf %17, %10 : vector<32x128xf32>
    %cst_16 = arith.constant 0.000000e+00 : f32
    %19 = vector.broadcast %cst_16 : f32 to vector<32x128xf32>
    %20 = arith.maximumf %18, %19 : vector<32x128xf32>
    %c0_17 = arith.constant 0 : index
    %c0_18 = arith.constant 0 : index
    %21 = vector.load %arg8[%c0_17, %c0_18] : memref<1x32xf32, #tpu.memory_space<vmem>>, vector<1x32xf32>
    %cst_19 = arith.constant dense<0.000000e+00> : vector<1x128xf32>
    %22 = tpu.matmul %21, %20, %cst_19 {dimension_numbers = #tpu.dot_dimension_numbers<[1], [0], [0], [1], [0, 0, 1, 1], [], []>} : vector<1x32xf32>, vector<32x128xf32>, vector<1x128xf32> -> vector<1x128xf32>
    %c0_20 = arith.constant 0 : index
    %c0_21 = arith.constant 0 : index
    %23 = memref.load %arg9[%c0_20, %c0_21] : memref<1x1xf32, #tpu.memory_space<smem>>
    %24 = vector.broadcast %23 : f32 to vector<1x128xf32>
    %25 = arith.addf %22, %24 : vector<1x128xf32>
    %26 = arith.negf %25 : vector<1x128xf32>
    %27 = math.exp %26 : vector<1x128xf32>
    %cst_22 = arith.constant 1.000000e+00 : f32
    %28 = vector.broadcast %cst_22 : f32 to vector<1x128xf32>
    %29 = arith.addf %28, %27 : vector<1x128xf32>
    %30 = arith.divf %28, %29 : vector<1x128xf32>
    %cst_23 = arith.constant 1.000000e+00 : f32
    %31 = vector.broadcast %cst_23 : f32 to vector<1x128xf32>
    %32 = arith.addf %31, %30 : vector<1x128xf32>
    %33 = vector.broadcast %32 : vector<1x128xf32> to vector<32x128xf32>
    %34 = arith.mulf %3, %33 : vector<32x128xf32>
    %c0_24 = arith.constant 0 : index
    %c0_25 = arith.constant 0 : index
    %c0_26 = arith.constant 0 : index
    %35 = vector.load %arg10[%c0_24, %c0_25, %c0_26] : memref<1x32x128xf32, #tpu.memory_space<vmem>>, vector<1x32x128xf32>
    %36 = vector.shape_cast %35 : vector<1x32x128xf32> to vector<32x128xf32>
    %37 = vector.shape_cast %34 : vector<32x128xf32> to vector<1x32x128xf32>
    tpu.vector_store %arg10[%c0_24, %c0_25, %c0_26], %37 {strides = array<i32>} : memref<1x32x128xf32, #tpu.memory_space<vmem>>, vector<1x32x128xf32>,
    return
  }
  func.func @transform_0(%arg0: i32, %arg1: i32) -> (i32, i32, i32) {
    %c0_i32 = arith.constant 0 : i32
    %c0_i32_0 = arith.constant 0 : i32
    return %arg0, %c0_i32, %arg1 : i32, i32, i32
  }
  func.func @transform_1(%arg0: i32, %arg1: i32) -> (i32, i32, i32) {
    %c0_i32 = arith.constant 0 : i32
    %c0_i32_0 = arith.constant 0 : i32
    return %arg0, %c0_i32, %arg1 : i32, i32, i32
  }
  func.func @transform_2(%arg0: i32, %arg1: i32) -> (i32, i32) {
    %c0_i32 = arith.constant 0 : i32
    %c0_i32_0 = arith.constant 0 : i32
    %c0_i32_1 = arith.constant 0 : i32
    return %c0_i32, %c0_i32_0 : i32, i32
  }
  func.func @transform_3(%arg0: i32, %arg1: i32) -> (i32, i32) {
    %c0_i32 = arith.constant 0 : i32
    %c0_i32_0 = arith.constant 0 : i32
    %c0_i32_1 = arith.constant 0 : i32
    return %c0_i32, %c0_i32_0 : i32, i32
  }
  func.func @transform_4(%arg0: i32, %arg1: i32) -> (i32, i32) {
    %c0_i32 = arith.constant 0 : i32
    %c0_i32_0 = arith.constant 0 : i32
    %c0_i32_1 = arith.constant 0 : i32
    return %c0_i32, %c0_i32_0 : i32, i32
  }
  func.func @transform_5(%arg0: i32, %arg1: i32) -> (i32, i32) {
    %c0_i32 = arith.constant 0 : i32
    %c0_i32_0 = arith.constant 0 : i32
    %c0_i32_1 = arith.constant 0 : i32
    return %c0_i32, %c0_i32_0 : i32, i32
  }
  func.func @transform_6(%arg0: i32, %arg1: i32) -> (i32, i32) {
    %c0_i32 = arith.constant 0 : i32
    %c0_i32_0 = arith.constant 0 : i32
    %c0_i32_1 = arith.constant 0 : i32
    return %c0_i32, %c0_i32_0 : i32, i32
  }
  func.func @transform_7(%arg0: i32, %arg1: i32) -> (i32, i32) {
    %c0_i32 = arith.constant 0 : i32
    %c0_i32_0 = arith.constant 0 : i32
    %c0_i32_1 = arith.constant 0 : i32
    return %c0_i32, %c0_i32_0 : i32, i32
  }
  func.func @transform_8(%arg0: i32, %arg1: i32) -> (i32, i32, i32) {
    %c0_i32 = arith.constant 0 : i32
    %c0_i32_0 = arith.constant 0 : i32
    return %arg0, %c0_i32, %arg1 : i32, i32, i32
  }
}

</mosaic_0001>

<llo_original>
// kernel: tpu_custom_call.1
$region0: #{tpu_custom_call.1}
  #allocation0 [shape = 'u32[]', space=smem, size = 0x4, offset = 0x4, fixed_abs, tag = 'smem constant byte address 0x4 - core index']
  #allocation1 [shape = 'u32[144,128]{1,0:T(1,128)}', space=vmem, size = 0x12000, scoped, tag = 'internal scratch']
  #allocation2 [shape = 'f32[1,1]{1,0:T(1,128)S(6)}', space=smem, size = 0x200, scoped, tag = 'scoped memory for tpu_custom_call.1']
  %s0 = inlined_call_operand.hbm [shape: f32[2,32,256], index: 0, kind: input, shape index: {}]
  %s1 = inlined_call_operand.hbm [shape: f32[2,32,256], index: 1, kind: input, shape index: {}]
  %s2 = inlined_call_operand.vmem [shape: f32[32,32], index: 2, kind: input, shape index: {}]
  %s3 = inlined_call_operand.vmem [shape: f32[32,32], index: 3, kind: input, shape index: {}]
  %s4 = inlined_call_operand.vmem [shape: f32[32,1], index: 4, kind: input, shape index: {}]
  %s5 = inlined_call_operand.vmem [shape: f32[32,1], index: 5, kind: input, shape index: {}]
  %s6 = inlined_call_operand.vmem [shape: f32[1,32], index: 6, kind: input, shape index: {}]
  %s7 = inlined_call_operand.<no memory space> [shape: f32[1,1], index: 7, kind: input, shape index: {}]
  %s8 = inlined_call_operand.hbm [shape: f32[2,32,256], index: 8, kind: output, shape index: {}]
  %s9 = sld [smem:[#allocation0]]
  $region73: #{tpu_custom_call.1} parent=0
    _
  %s11 = ssub.s32 1, %s9
  %s12 = scalar_select 0, %s11, %s9
  %13 = sst [smem:[#allocation2]] %s7
  $region1: #{tpu_custom_call.1} parent=0
    #allocation3 [shape = 'u8[32768]{0}', space=vmem, size = 0x8000, scoped, tag = 'input window, operand 0']
    #allocation4 [shape = 's32[2]{0}', space=sflag, size = 0x8, scoped, tag = 'scoped memory for tpu_custom_call.1']
    #allocation5 [shape = 's32[2]{0}', space=sflag, size = 0x8, scoped, tag = 'scoped memory for tpu_custom_call.1']
    #allocation6 [shape = 'u8[32768]{0}', space=vmem, size = 0x8000, scoped, tag = 'input window, operand 1']
    #allocation7 [shape = 's32[2]{0}', space=sflag, size = 0x8, scoped, tag = 'scoped memory for tpu_custom_call.1']
    #allocation8 [shape = 'u8[32768]{0}', space=vmem, size = 0x8000, scoped, tag = 'output window, operand 0']
    %14 = vsyncpa [#allocation4], 0
    %s15 = scalar_lea.sflag [#allocation4], 1
    %16 = vsyncpa %s15, 0
    %17 = vsyncpa [#allocation7], 0
    %s18 = scalar_lea.sflag [#allocation7], 1
    %19 = vsyncpa %s18, 0
    %20 = vsyncpa [#allocation5], 0
    %s21 = scalar_lea.sflag [#allocation5], 1
    %22 = vsyncpa %s21, 0
    loop: start=0, step=1, limit=6
    $region2: #{tpu_custom_call.1} parent=1 // loop_pre_header
      _
    $region3: #{tpu_custom_call.1} parent=1 // loop_header
      %s24 = sphi 0, %s28
      %p25 = scmp.ge.s32.totalorder %s24, 6
      %s31 = sphi 0, %s43
      %s32 = sphi 0, %s39
      %s33 = sphi 0, %s31
      %s34 = sphi 0, %s32
      %s35 = sphi 0, %s33
      %s36 = sphi 0, %s34
      %s48 = sphi 0, %s50
      %s51 = sphi 0, %s48
      %s52 = sphi 0, %s51
      %s68 = sphi 0, %s52
      %s76 = sphi 0, %s78
      %s79 = sphi 0, %s76
      %s80 = sphi 0, %s79
      %s96 = sphi 0, %s80
      %s100 = sphi 0, %s100
      %s102 = sphi 0, %s100
      %s103 = sphi 0, %s102
      %s117 = sphi 0, %s103
      %s121 = sphi 0, %s121
      %s123 = sphi 0, %s121
      %s124 = sphi 0, %s123
      %s138 = sphi 0, %s124
      %s142 = sphi 0, %s142
      %s144 = sphi 0, %s142
      %s145 = sphi 0, %s144
      %s159 = sphi 0, %s145
      %s163 = sphi 0, %s163
      %s165 = sphi 0, %s163
      %s166 = sphi 0, %s165
      %s180 = sphi 0, %s166
      %s184 = sphi 0, %s184
      %s186 = sphi 0, %s184
      %s187 = sphi 0, %s186
      %s201 = sphi 0, %s187
      %s205 = sphi 0, %s205
      %s207 = sphi 0, %s205
      %s208 = sphi 0, %s207
      %s222 = sphi 0, %s208
      %s230 = sphi 0, %s232
      %s233 = sphi 0, %s230
      %s234 = sphi 0, %s233
      %s250 = sphi 0, %s234
    $region4: #{tpu_custom_call.1} parent=1 // loop_header_branch
      %27 = sbr.rel (%p25) target = $region8
    $region5: #{tpu_custom_call.1} parent=1 // loop_body
      %s29 = ssub.s32 %s24, 1
      %s30 = ssub.s32 %s24, 2
      %s37 = sadd.s32 1, %s32
      %p38 = scmp.ge.s32.totalorder %s37, 2
      %s39 = scalar_select %p38, 0, %s37
      %s40 = sadd.s32 1, %s31
      %s41 = scalar_select %p38, %s40, %s31
      %p42 = scmp.ge.s32.totalorder %s41, 2
      %s43 = scalar_select %p42, 0, %s41
      %s44 = ssub.s32 %s31, %s43
      %s45 = ssub.s32 %s32, %s39
      %s46 = sor.u32 %s44, %s45
      %p47 = scmp.eq.s32.totalorder %s46, 0
      %s49 = sadd.s32 %s48, 1
      %s50 = scalar_select %p47, %s48, %s49
      %p53 = pneg %p47
      %p54 = scmp.eq.s32.totalorder %s24, 3
      %p55 = por %p53, %p54
      %p56 = scmp.ne.s32.totalorder %s48, %s51
      %p57 = scmp.eq.s32.totalorder %s24, 0
      %p58 = por %p56, %p57
      %p59 = scmp.ne.s32.totalorder %s48, %s51
      %p60 = scmp.eq.s32.totalorder %s29, 3
      %p61 = por %p59, %p60
      %p62 = scmp.ne.s32.totalorder %s51, %s52
      %p63 = scmp.eq.s32.totalorder %s29, 0
      %p64 = por %p62, %p63
      %p65 = scmp.ne.s32.totalorder %s51, %s52
      %p66 = scmp.eq.s32.totalorder %s30, 3
      %p67 = por %p65, %p66
      %p69 = scmp.ne.s32.totalorder %s52, %s68
      %p70 = scmp.eq.s32.totalorder %s30, 0
      %p71 = por %p69, %p70
      %s72 = ssub.s32 %s31, %s43
      %s73 = ssub.s32 %s32, %s39
      %s74 = sor.u32 %s72, %s73
      %p75 = scmp.eq.s32.totalorder %s74, 0
      %s77 = sadd.s32 %s76, 1
      %s78 = scalar_select %p75, %s76, %s77
      %p81 = pneg %p75
      %p82 = scmp.eq.s32.totalorder %s24, 3
      %p83 = por %p81, %p82
      %p84 = scmp.ne.s32.totalorder %s76, %s79
      %p85 = scmp.eq.s32.totalorder %s24, 0
      %p86 = por %p84, %p85
      %p87 = scmp.ne.s32.totalorder %s76, %s79
      %p88 = scmp.eq.s32.totalorder %s29, 3
      %p89 = por %p87, %p88
      %p90 = scmp.ne.s32.totalorder %s79, %s80
      %p91 = scmp.eq.s32.totalorder %s29, 0
      %p92 = por %p90, %p91
      %p93 = scmp.ne.s32.totalorder %s79, %s80
      %p94 = scmp.eq.s32.totalorder %s30, 3
      %p95 = por %p93, %p94
      %p97 = scmp.ne.s32.totalorder %s80, %s96
      %p98 = scmp.eq.s32.totalorder %s30, 0
      %p99 = por %p97, %p98
      %s101 = sadd.s32 %s100, 1
      %p104 = scmp.eq.s32.totalorder %s24, 3
      %p105 = scmp.ne.s32.totalorder %s100, %s102
      %p106 = scmp.eq.s32.totalorder %s24, 0
      %p107 = por %p105, %p106
      %p108 = scmp.ne.s32.totalorder %s100, %s102
      %p109 = scmp.eq.s32.totalorder %s29, 3
      %p110 = por %p108, %p109
      %p111 = scmp.ne.s32.totalorder %s102, %s103
      %p112 = scmp.eq.s32.totalorder %s29, 0
      %p113 = por %p111, %p112
      %p114 = scmp.ne.s32.totalorder %s102, %s103
      %p115 = scmp.eq.s32.totalorder %s30, 3
      %p116 = por %p114, %p115
      %p118 = scmp.ne.s32.totalorder %s103, %s117
      %p119 = scmp.eq.s32.totalorder %s30, 0
      %p120 = por %p118, %p119
      %s122 = sadd.s32 %s121, 1
      %p125 = scmp.eq.s32.totalorder %s24, 3
      %p126 = scmp.ne.s32.totalorder %s121, %s123
      %p127 = scmp.eq.s32.totalorder %s24, 0
      %p128 = por %p126, %p127
      %p129 = scmp.ne.s32.totalorder %s121, %s123
      %p130 = scmp.eq.s32.totalorder %s29, 3
      %p131 = por %p129, %p130
      %p132 = scmp.ne.s32.totalorder %s123, %s124
      %p133 = scmp.eq.s32.totalorder %s29, 0
      %p134 = por %p132, %p133
      %p135 = scmp.ne.s32.totalorder %s123, %s124
      %p136 = scmp.eq.s32.totalorder %s30, 3
      %p137 = por %p135, %p136
      %p139 = scmp.ne.s32.totalorder %s124, %s138
      %p140 = scmp.eq.s32.totalorder %s30, 0
      %p141 = por %p139, %p140
      %s143 = sadd.s32 %s142, 1
      %p146 = scmp.eq.s32.totalorder %s24, 3
      %p147 = scmp.ne.s32.totalorder %s142, %s144
      %p148 = scmp.eq.s32.totalorder %s24, 0
      %p149 = por %p147, %p148
      %p150 = scmp.ne.s32.totalorder %s142, %s144
      %p151 = scmp.eq.s32.totalorder %s29, 3
      %p152 = por %p150, %p151
      %p153 = scmp.ne.s32.totalorder %s144, %s145
      %p154 = scmp.eq.s32.totalorder %s29, 0
      %p155 = por %p153, %p154
      %p156 = scmp.ne.s32.totalorder %s144, %s145
      %p157 = scmp.eq.s32.totalorder %s30, 3
      %p158 = por %p156, %p157
      %p160 = scmp.ne.s32.totalorder %s145, %s159
      %p161 = scmp.eq.s32.totalorder %s30, 0
      %p162 = por %p160, %p161
      %s164 = sadd.s32 %s163, 1
      %p167 = scmp.eq.s32.totalorder %s24, 3
      %p168 = scmp.ne.s32.totalorder %s163, %s165
      %p169 = scmp.eq.s32.totalorder %s24, 0
      %p170 = por %p168, %p169
      %p171 = scmp.ne.s32.totalorder %s163, %s165
      %p172 = scmp.eq.s32.totalorder %s29, 3
      %p173 = por %p171, %p172
      %p174 = scmp.ne.s32.totalorder %s165, %s166
      %p175 = scmp.eq.s32.totalorder %s29, 0
      %p176 = por %p174, %p175
      %p177 = scmp.ne.s32.totalorder %s165, %s166
      %p178 = scmp.eq.s32.totalorder %s30, 3
      %p179 = por %p177, %p178
      %p181 = scmp.ne.s32.totalorder %s166, %s180
      %p182 = scmp.eq.s32.totalorder %s30, 0
      %p183 = por %p181, %p182
      %s185 = sadd.s32 %s184, 1
      %p188 = scmp.eq.s32.totalorder %s24, 3
      %p189 = scmp.ne.s32.totalorder %s184, %s186
      %p190 = scmp.eq.s32.totalorder %s24, 0
      %p191 = por %p189, %p190
      %p192 = scmp.ne.s32.totalorder %s184, %s186
      %p193 = scmp.eq.s32.totalorder %s29, 3
      %p194 = por %p192, %p193
      %p195 = scmp.ne.s32.totalorder %s186, %s187
      %p196 = scmp.eq.s32.totalorder %s29, 0
      %p197 = por %p195, %p196
      %p198 = scmp.ne.s32.totalorder %s186, %s187
      %p199 = scmp.eq.s32.totalorder %s30, 3
      %p200 = por %p198, %p199
      %p202 = scmp.ne.s32.totalorder %s187, %s201
      %p203 = scmp.eq.s32.totalorder %s30, 0
      %p204 = por %p202, %p203
      %s206 = sadd.s32 %s205, 1
      %p209 = scmp.eq.s32.totalorder %s24, 3
      %p210 = scmp.ne.s32.totalorder %s205, %s207
      %p211 = scmp.eq.s32.totalorder %s24, 0
      %p212 = por %p210, %p211
      %p213 = scmp.ne.s32.totalorder %s205, %s207
      %p214 = scmp.eq.s32.totalorder %s29, 3
      %p215 = por %p213, %p214
      %p216 = scmp.ne.s32.totalorder %s207, %s208
      %p217 = scmp.eq.s32.totalorder %s29, 0
      %p218 = por %p216, %p217
      %p219 = scmp.ne.s32.totalorder %s207, %s208
      %p220 = scmp.eq.s32.totalorder %s30, 3
      %p221 = por %p219, %p220
      %p223 = scmp.ne.s32.totalorder %s208, %s222
      %p224 = scmp.eq.s32.totalorder %s30, 0
      %p225 = por %p223, %p224
      %s226 = ssub.s32 %s31, %s43
      %s227 = ssub.s32 %s32, %s39
      %s228 = sor.u32 %s226, %s227
      %p229 = scmp.eq.s32.totalorder %s228, 0
      %s231 = sadd.s32 %s230, 1
      %s232 = scalar_select %p229, %s230, %s231
      %p235 = pneg %p229
      %p236 = scmp.eq.s32.totalorder %s24, 3
      %p237 = por %p235, %p236
      %p238 = scmp.ne.s32.totalorder %s230, %s233
      %p239 = scmp.eq.s32.totalorder %s24, 0
      %p240 = por %p238, %p239
      %p241 = scmp.ne.s32.totalorder %s230, %s233
      %p242 = scmp.eq.s32.totalorder %s29, 3
      %p243 = por %p241, %p242
      %p244 = scmp.ne.s32.totalorder %s233, %s234
      %p245 = scmp.eq.s32.totalorder %s29, 0
      %p246 = por %p244, %p245
      %p247 = scmp.ne.s32.totalorder %s233, %s234
      %p248 = scmp.eq.s32.totalorder %s30, 3
      %p249 = por %p247, %p248
      %p251 = scmp.ne.s32.totalorder %s234, %s250
      %p252 = scmp.eq.s32.totalorder %s30, 0
      %p253 = por %p251, %p252
      %p254 = scmp.le.s32.totalorder 1, %s24
      %p255 = scmp.lt.s32.totalorder %s24, 5
      %p256 = pnand %p254, %p255
      %p257 = pneg %p256
      // Predicated region
      $region9: #{tpu_custom_call.1} parent=5 // pred_check
        _
      $region10: #{tpu_custom_call.1} parent=5 // pred_check_branch
        %259 = sbr.rel (%p256) target = $region12
      $region11: #{tpu_custom_call.1} parent=5 // pred_region
        %s260 = ssub.s32 %s24, 1
        // Predicated region
        $region13: #{tpu_custom_call.1} parent=11 // pred_check
          %p261 = pneg %p113
        $region14: #{tpu_custom_call.1} parent=11 // pred_check_branch
          %263 = sbr.rel (%p261) target = $region16
        $region15: #{tpu_custom_call.1} parent=11 // pred_region
          _
        $region16: #{tpu_custom_call.1} parent=11 // pred_fallthru
          _
        // Predicated region
        $region17: #{tpu_custom_call.1} parent=11 // pred_check
          %p264 = pneg %p134
        $region18: #{tpu_custom_call.1} parent=11 // pred_check_branch
          %266 = sbr.rel (%p264) target = $region20
        $region19: #{tpu_custom_call.1} parent=11 // pred_region
          _
        $region20: #{tpu_custom_call.1} parent=11 // pred_fallthru
          _
        // Predicated region
        $region21: #{tpu_custom_call.1} parent=11 // pred_check
          %p267 = pneg %p155
        $region22: #{tpu_custom_call.1} parent=11 // pred_check_branch
          %269 = sbr.rel (%p267) target = $region24
        $region23: #{tpu_custom_call.1} parent=11 // pred_region
          _
        $region24: #{tpu_custom_call.1} parent=11 // pred_fallthru
          _
        // Predicated region
        $region25: #{tpu_custom_call.1} parent=11 // pred_check
          %p270 = pneg %p176
        $region26: #{tpu_custom_call.1} parent=11 // pred_check_branch
          %272 = sbr.rel (%p270) target = $region28
        $region27: #{tpu_custom_call.1} parent=11 // pred_region
          _
        $region28: #{tpu_custom_call.1} parent=11 // pred_fallthru
          _
        // Predicated region
        $region29: #{tpu_custom_call.1} parent=11 // pred_check
          %p273 = pneg %p197
        $region30: #{tpu_custom_call.1} parent=11 // pred_check_branch
          %275 = sbr.rel (%p273) target = $region32
        $region31: #{tpu_custom_call.1} parent=11 // pred_region
          _
        $region32: #{tpu_custom_call.1} parent=11 // pred_fallthru
          _
        // Predicated region
        $region33: #{tpu_custom_call.1} parent=11 // pred_check
          %p276 = pneg %p218
        $region34: #{tpu_custom_call.1} parent=11 // pred_check_branch
          %278 = sbr.rel (%p276) target = $region36
        $region35: #{tpu_custom_call.1} parent=11 // pred_region
          _
        $region36: #{tpu_custom_call.1} parent=11 // pred_fallthru
          _
      $region12: #{tpu_custom_call.1} parent=5 // pred_fallthru
        _
      %p279 = scmp.lt.s32.totalorder %s24, 4
      // Predicated region
      $region37: #{tpu_custom_call.1} parent=5 // pred_check
        %p280 = pneg %p279
      $region38: #{tpu_custom_call.1} parent=5 // pred_check_branch
        %282 = sbr.rel (%p280) target = $region40
      $region39: #{tpu_custom_call.1} parent=5 // pred_region
        // Predicated region
        $region41: #{tpu_custom_call.1} parent=39 // pred_check
          %p283 = pneg %p58
        $region42: #{tpu_custom_call.1} parent=39 // pred_check_branch
          %285 = sbr.rel (%p283) target = $region44
        $region43: #{tpu_custom_call.1} parent=39 // pred_region
          %s286 = sand.u32 %s48, 1
          %s287 = scalar_lea.sflag [#allocation4], %s286
          %s288 = sand.u32 %s48, 1
          %s289 = smul.addr %s288, 32
          %s290 = scalar_lea.vmem [#allocation3], %s289
          %s292 = ssub.s32 512, 512
          %293 = vsyncadd %s287, %s292
          %s294 = smul.addr %s31, 8
          %s295 = sadd.s32 %s32, %s294
          %s296 = smul.addr %s295, 128
          %s297 = scalar_lea.hbm %s0, %s296
          %s298 = sshll.u32 %s290, 4
          %s299 = int_to_ptr.vmem [resolvable:$true] %s298
          %304 = dma.hbm_to_vmem [thread:$0]  %s297, 512, %s299, %s287, 256, 128, 8
        $region44: #{tpu_custom_call.1} parent=39 // pred_fallthru
          _
        // Predicated region
        $region45: #{tpu_custom_call.1} parent=39 // pred_check
          %p305 = pneg %p86
        $region46: #{tpu_custom_call.1} parent=39 // pred_check_branch
          %307 = sbr.rel (%p305) target = $region48
        $region47: #{tpu_custom_call.1} parent=39 // pred_region
          %s308 = sand.u32 %s76, 1
          %s309 = scalar_lea.sflag [#allocation7], %s308
          %s310 = sand.u32 %s76, 1
          %s311 = smul.addr %s310, 32
          %s312 = scalar_lea.vmem [#allocation6], %s311
          %s314 = ssub.s32 512, 512
          %315 = vsyncadd %s309, %s314
          %s316 = smul.addr %s31, 8
          %s317 = sadd.s32 %s32, %s316
          %s318 = smul.addr %s317, 128
          %s319 = scalar_lea.hbm %s1, %s318
          %s320 = sshll.u32 %s312, 4
          %s321 = int_to_ptr.vmem [resolvable:$true] %s320
          %326 = dma.hbm_to_vmem [thread:$0]  %s319, 512, %s321, %s309, 256, 128, 8
        $region48: #{tpu_custom_call.1} parent=39 // pred_fallthru
          _
      $region40: #{tpu_custom_call.1} parent=5 // pred_fallthru
        _
      %p327 = scmp.le.s32.totalorder 1, %s24
      %p328 = scmp.lt.s32.totalorder %s24, 5
      %p329 = pnand %p327, %p328
      %p330 = pneg %p329
      // Predicated region
      $region49: #{tpu_custom_call.1} parent=5 // pred_check
        _
      $region50: #{tpu_custom_call.1} parent=5 // pred_check_branch
        %332 = sbr.rel (%p329) target = $region52
      $region51: #{tpu_custom_call.1} parent=5 // pred_region
        %s333 = ssub.s32 %s24, 1
        %s334 = sand.u32 %s51, 1
        %s335 = scalar_lea.sflag [#allocation4], %s334
        %s336 = sand.u32 %s51, 1
        %s337 = smul.addr %s336, 32
        %s338 = scalar_lea.vmem [#allocation3], %s337
        // Predicated region
        $region53: #{tpu_custom_call.1} parent=51 // pred_check
          %p339 = pneg %p64
        $region54: #{tpu_custom_call.1} parent=51 // pred_check_branch
          %341 = sbr.rel (%p339) target = $region56
        $region55: #{tpu_custom_call.1} parent=51 // pred_region
          %342 = dma.done %s335, 512
        $region56: #{tpu_custom_call.1} parent=51 // pred_fallthru
          _
        %s343 = sand.u32 %s79, 1
        %s344 = scalar_lea.sflag [#allocation7], %s343
        %s345 = sand.u32 %s79, 1
        %s346 = smul.addr %s345, 32
        %s347 = scalar_lea.vmem [#allocation6], %s346
        // Predicated region
        $region57: #{tpu_custom_call.1} parent=51 // pred_check
          %p348 = pneg %p92
        $region58: #{tpu_custom_call.1} parent=51 // pred_check_branch
          %350 = sbr.rel (%p348) target = $region60
        $region59: #{tpu_custom_call.1} parent=51 // pred_region
          %351 = dma.done %s344, 512
        $region60: #{tpu_custom_call.1} parent=51 // pred_fallthru
          _
        %s352 = sand.u32 %s51, 1
        %s353 = scalar_lea.sflag [#allocation4], %s352
        %s354 = sand.u32 %s51, 1
        %s355 = smul.addr %s354, 32
        %s356 = scalar_lea.vmem [#allocation3], %s355
        %p357 = pneg %p64
        %p358 = pneg %p61
        %s359 = sand.u32 %s79, 1
        %s360 = scalar_lea.sflag [#allocation7], %s359
        %s361 = sand.u32 %s79, 1
        %s362 = smul.addr %s361, 32
        %s363 = scalar_lea.vmem [#allocation6], %s362
        %p364 = pneg %p92
        %p365 = pneg %p89
        %p366 = pneg %p113
        %p367 = pneg %p110
        %p368 = pneg %p134
        %p369 = pneg %p131
        %p370 = pneg %p155
        %p371 = pneg %p152
        %p372 = pneg %p176
        %p373 = pneg %p173
        %p374 = pneg %p197
        %p375 = pneg %p194
        %p376 = pneg %p218
        %p377 = pneg %p215
        %p378 = pneg %p246
        %p379 = pneg %p243
        %s380 = sand.u32 %s233, 1
        %s381 = scalar_lea.sflag [#allocation5], %s380
        %s382 = sand.u32 %s233, 1
        %s383 = smul.addr %s382, 32
        %s384 = scalar_lea.vmem [#allocation8], %s383
        %v385 = vld [vmem:[%s338] sm:$0xff]
        %v386 = vld [vmem:[%s338 + $0x8] sm:$0xff]
        %v387 = vld [vmem:[%s338 + $0x10] sm:$0xff]
        %v388 = vld [vmem:[%s338 + $0x18] sm:$0xff]
        %v389 = vld [vmem:[%s347] sm:$0xff]
        %v390 = vld [vmem:[%s347 + $0x8] sm:$0xff]
        %v391 = vld [vmem:[%s347 + $0x10] sm:$0xff]
        %v392 = vld [vmem:[%s347 + $0x18] sm:$0xff]
        %v393 = vld [vmem:[%s2] sm:$0xff]
        %v394 = vld [vmem:[%s2 + $0x8] sm:$0xff]
        %v395 = vld [vmem:[%s2 + $0x10] sm:$0xff]
        %v396 = vld [vmem:[%s2 + $0x18] sm:$0xff]
        %v397 = vld [vmem:[%s4] sm:$0xff]
        %v398 = vld [vmem:[%s4 + $0x8] sm:$0xff]
        %v399 = vld [vmem:[%s4 + $0x10] sm:$0xff]
        %v400 = vld [vmem:[%s4 + $0x18] sm:$0xff]
        %402 = vset.pattern.permute.xlu0 0
        %403 = vperm.xlu0 %402, %v397
        %v404 = vpop.permute.xlu0 %403
        %407 = vset.pattern.permute.xlu0 0
        %408 = vperm.xlu0 %407, %v398
        %v409 = vpop.permute.xlu0 %408
        %412 = vset.pattern.permute.xlu0 0
        %413 = vperm.xlu0 %412, %v399
        %v414 = vpop.permute.xlu0 %413
        %417 = vset.pattern.permute.xlu0 0
        %418 = vperm.xlu0 %417, %v400
        %v419 = vpop.permute.xlu0 %418
        %vm421 = vcmask 261120
        %v423 = vsel %vm421, %v393, 0
        %v426 = vsel %vm421, %v394, 0
        %v429 = vsel %vm421, %v395, 0
        %v432 = vsel %vm421, %v396, 0
        %434 = vmatprep.subr.mxu0 0.0
        %435 = vmatpush1.msra.mxu0 %v385
        %436 = vmatprep.subr.mxu0 0.0
        %437 = vmatpush1.msra.mxu0 %v386
        %438 = vmatprep.subr.mxu0 0.0
        %439 = vmatpush1.msra.mxu0 %v387
        %440 = vmatprep.subr.mxu0 0.0
        %441 = vmatpush1.msra.mxu0 %v388
        %442 = vmatprep.subr.mxu0 0.0
        %443 = vmatpush1.msra.mxu0 0.0
        %444 = vmatprep.subr.mxu0 0.0
        %445 = vmatpush1.msra.mxu0 0.0
        %446 = vmatprep.subr.mxu0 0.0
        %447 = vmatpush1.msra.mxu0 0.0
        %448 = vmatprep.subr.mxu0 0.0
        %449 = vmatpush1.msra.mxu0 0.0
        %450 = vmatprep.subr.mxu0 0.0
        %451 = vmatpush1.msra.mxu0 0.0
        %452 = vmatprep.subr.mxu0 0.0
        %453 = vmatpush1.msra.mxu0 0.0
        %454 = vmatprep.subr.mxu0 0.0
        %455 = vmatpush1.msra.mxu0 0.0
        %456 = vmatprep.subr.mxu0 0.0
        %457 = vmatpush1.msra.mxu0 0.0
        %458 = vmatprep.subr.mxu0 0.0
        %459 = vmatpush1.msra.mxu0 0.0
        %460 = vmatprep.subr.mxu0 0.0
        %461 = vmatpush1.msra.mxu0 0.0
        %462 = vmatprep.subr.mxu0 0.0
        %463 = vmatpush1.msra.mxu0 0.0
        %464 = vmatprep.subr.mxu0 0.0
        %465 = vmatpush1.msra.mxu0 0.0
        %466 = vmatprep.subr.mxu0 0.0
        %467 = vmatpush1.msra.mxu0 0.0
        %468 = vmatprep.subr.mxu0 0.0
        %469 = vmatpush1.msra.mxu0 0.0
        %470 = vmatprep.subr.mxu0 0.0
        %471 = vmatpush1.msra.mxu0 0.0
        %472 = vmatprep.subr.mxu0 0.0
        %473 = vmatpush1.msra.mxu0 0.0
        %474 = vmatprep.subr.mxu0 0.0
        %475 = vmatpush1.msra.mxu0 0.0
        %476 = vmatprep.subr.mxu0 0.0
        %477 = vmatpush1.msra.mxu0 0.0
        %478 = vmatprep.subr.mxu0 0.0
        %479 = vmatpush1.msra.mxu0 0.0
        %480 = vmatprep.subr.mxu0 0.0
        %481 = vmatpush1.msra.mxu0 0.0
        %482 = vmatprep.subr.mxu0 0.0
        %483 = vmatpush1.msra.mxu0 0.0
        %484 = vmatprep.subr.mxu0 0.0
        %485 = vmatpush1.msra.mxu0 0.0
        %486 = vmatprep.subr.mxu0 0.0
        %487 = vmatpush1.msra.mxu0 0.0
        %488 = vmatprep.subr.mxu0 0.0
        %489 = vmatpush1.msra.mxu0 0.0
        %490 = vmatprep.subr.mxu0 0.0
        %491 = vmatpush1.msra.mxu0 0.0
        %492 = vmatprep.subr.mxu0 0.0
        %493 = vmatpush1.msra.mxu0 0.0
        %494 = vmatprep.subr.mxu0 0.0
        %495 = vmatpush1.msra.mxu0 0.0
        %496 = vmatprep.subr.mxu0 0.0
        %497 = vmatpush1.msra.mxu0 0.0
        %498 = vmatprep.mubr.f32.mxu0 0.0
        %499 = vmatmul.mubr.f32.gmra.mrb[0].mxu0 %v423
        %v500 = vpop.f32.mrb[0].mxu0
        %v501 = vadd.f32 %v404, %v500
        %v502 = vpop.f32.mrb[0].mxu0
        %503 = vmatprep.mubr.f32.mxu0 0.0
        %504 = vmatmul.mubr.f32.gmra.mrb[0].mxu0 %v426
        %v505 = vpop.f32.mrb[0].mxu0
        %v506 = vadd.f32 %v409, %v505
        %v507 = vpop.f32.mrb[0].mxu0
        %508 = vmatprep.mubr.f32.mxu0 0.0
        %509 = vmatmul.mubr.f32.gmra.mrb[0].mxu0 %v429
        %v510 = vpop.f32.mrb[0].mxu0
        %v511 = vadd.f32 %v414, %v510
        %v512 = vpop.f32.mrb[0].mxu0
        %513 = vmatprep.mubr.f32.mxu0 0.0
        %514 = vmatmul.mubr.f32.gmra.mrb[0].mxu0 %v432
        %v515 = vpop.f32.mrb[0].mxu0
        %v516 = vadd.f32 %v419, %v515
        %v517 = vpop.f32.mrb[0].mxu0
        %518 = vdwg.mxu0
        %v519 = vmax.f32 %v501, 0.0
        %v520 = vmax.f32 %v506, 0.0
        %v521 = vmax.f32 %v511, 0.0
        %v522 = vmax.f32 %v516, 0.0
        %v523 = vld [vmem:[%s3] sm:$0xff]
        %v524 = vld [vmem:[%s3 + $0x8] sm:$0xff]
        %v525 = vld [vmem:[%s3 + $0x10] sm:$0xff]
        %v526 = vld [vmem:[%s3 + $0x18] sm:$0xff]
        %v527 = vld [vmem:[%s5] sm:$0xff]
        %v528 = vld [vmem:[%s5 + $0x8] sm:$0xff]
        %v529 = vld [vmem:[%s5 + $0x10] sm:$0xff]
        %v530 = vld [vmem:[%s5 + $0x18] sm:$0xff]
        %532 = vset.pattern.permute.xlu0 0
        %533 = vperm.xlu0 %532, %v527
        %v534 = vpop.permute.xlu0 %533
        %537 = vset.pattern.permute.xlu0 0
        %538 = vperm.xlu0 %537, %v528
        %v539 = vpop.permute.xlu0 %538
        %542 = vset.pattern.permute.xlu0 0
        %543 = vperm.xlu0 %542, %v529
        %v544 = vpop.permute.xlu0 %543
        %547 = vset.pattern.permute.xlu0 0
        %548 = vperm.xlu0 %547, %v530
        %v549 = vpop.permute.xlu0 %548
        %v552 = vsel %vm421, %v523, 0
        %v555 = vsel %vm421, %v524, 0
        %v558 = vsel %vm421, %v525, 0
        %v561 = vsel %vm421, %v526, 0
        %563 = vmatprep.subr.mxu0 0.0
        %564 = vmatpush1.msra.mxu0 %v389
        %565 = vmatprep.subr.mxu0 0.0
        %566 = vmatpush1.msra.mxu0 %v390
        %567 = vmatprep.subr.mxu0 0.0
        %568 = vmatpush1.msra.mxu0 %v391
        %569 = vmatprep.subr.mxu0 0.0
        %570 = vmatpush1.msra.mxu0 %v392
        %571 = vmatprep.subr.mxu0 0.0
        %572 = vmatpush1.msra.mxu0 0.0
        %573 = vmatprep.subr.mxu0 0.0
        %574 = vmatpush1.msra.mxu0 0.0
        %575 = vmatprep.subr.mxu0 0.0
        %576 = vmatpush1.msra.mxu0 0.0
        %577 = vmatprep.subr.mxu0 0.0
        %578 = vmatpush1.msra.mxu0 0.0
        %579 = vmatprep.subr.mxu0 0.0
        %580 = vmatpush1.msra.mxu0 0.0
        %581 = vmatprep.subr.mxu0 0.0
        %582 = vmatpush1.msra.mxu0 0.0
        %583 = vmatprep.subr.mxu0 0.0
        %584 = vmatpush1.msra.mxu0 0.0
        %585 = vmatprep.subr.mxu0 0.0
        %586 = vmatpush1.msra.mxu0 0.0
        %587 = vmatprep.subr.mxu0 0.0
        %588 = vmatpush1.msra.mxu0 0.0
        %589 = vmatprep.subr.mxu0 0.0
        %590 = vmatpush1.msra.mxu0 0.0
        %591 = vmatprep.subr.mxu0 0.0
        %592 = vmatpush1.msra.mxu0 0.0
        %593 = vmatprep.subr.mxu0 0.0
        %594 = vmatpush1.msra.mxu0 0.0
        %595 = vmatprep.subr.mxu0 0.0
        %596 = vmatpush1.msra.mxu0 0.0
        %597 = vmatprep.subr.mxu0 0.0
        %598 = vmatpush1.msra.mxu0 0.0
        %599 = vmatprep.subr.mxu0 0.0
        %600 = vmatpush1.msra.mxu0 0.0
        %601 = vmatprep.subr.mxu0 0.0
        %602 = vmatpush1.msra.mxu0 0.0
        %603 = vmatprep.subr.mxu0 0.0
        %604 = vmatpush1.msra.mxu0 0.0
        %605 = vmatprep.subr.mxu0 0.0
        %606 = vmatpush1.msra.mxu0 0.0
        %607 = vmatprep.subr.mxu0 0.0
        %608 = vmatpush1.msra.mxu0 0.0
        %609 = vmatprep.subr.mxu0 0.0
        %610 = vmatpush1.msra.mxu0 0.0
        %611 = vmatprep.subr.mxu0 0.0
        %612 = vmatpush1.msra.mxu0 0.0
        %613 = vmatprep.subr.mxu0 0.0
        %614 = vmatpush1.msra.mxu0 0.0
        %615 = vmatprep.subr.mxu0 0.0
        %616 = vmatpush1.msra.mxu0 0.0
        %617 = vmatprep.subr.mxu0 0.0
        %618 = vmatpush1.msra.mxu0 0.0
        %619 = vmatprep.subr.mxu0 0.0
        %620 = vmatpush1.msra.mxu0 0.0
        %621 = vmatprep.subr.mxu0 0.0
        %622 = vmatpush1.msra.mxu0 0.0
        %623 = vmatprep.subr.mxu0 0.0
        %624 = vmatpush1.msra.mxu0 0.0
        %625 = vmatprep.subr.mxu0 0.0
        %626 = vmatpush1.msra.mxu0 0.0
        %627 = vmatprep.mubr.f32.mxu0 0.0
        %628 = vmatmul.mubr.f32.gmra.mrb[0].mxu0 %v552
        %v629 = vpop.f32.mrb[0].mxu0
        %v630 = vadd.f32 %v534, %v629
        %v631 = vpop.f32.mrb[0].mxu0
        %632 = vmatprep.mubr.f32.mxu0 0.0
        %633 = vmatmul.mubr.f32.gmra.mrb[0].mxu0 %v555
        %v634 = vpop.f32.mrb[0].mxu0
        %v635 = vadd.f32 %v539, %v634
        %v636 = vpop.f32.mrb[0].mxu0
        %637 = vmatprep.mubr.f32.mxu0 0.0
        %638 = vmatmul.mubr.f32.gmra.mrb[0].mxu0 %v558
        %v639 = vpop.f32.mrb[0].mxu0
        %v640 = vadd.f32 %v544, %v639
        %v641 = vpop.f32.mrb[0].mxu0
        %642 = vmatprep.mubr.f32.mxu0 0.0
        %643 = vmatmul.mubr.f32.gmra.mrb[0].mxu0 %v561
        %v644 = vpop.f32.mrb[0].mxu0
        %v645 = vadd.f32 %v549, %v644
        %v646 = vpop.f32.mrb[0].mxu0
        %647 = vdwg.mxu0
        %v648 = vmax.f32 %v630, 0.0
        %v649 = vmax.f32 %v635, 0.0
        %v650 = vmax.f32 %v640, 0.0
        %v651 = vmax.f32 %v645, 0.0
        %v652 = vadd.f32 %v648, %v519
        %v653 = vadd.f32 %v649, %v520
        %v654 = vadd.f32 %v650, %v521
        %v655 = vadd.f32 %v651, %v522
        %v656 = vmax.f32 %v652, 0.0
        %v657 = vmax.f32 %v653, 0.0
        %v658 = vmax.f32 %v654, 0.0
        %v659 = vmax.f32 %v655, 0.0
        %v660 = vld [vmem:[%s6] sm:$0x1]
        %s661 = sld [smem:[#allocation2]]
        %v662 = vstv %s661
        %v664 = vsel %vm421, %v660, 0
        %666 = vmatprep.subr.mxu0 0.0
        %667 = vmatpush1.msra.mxu0 %v656
        %668 = vmatprep.subr.mxu0 0.0
        %669 = vmatpush1.msra.mxu0 %v657
        %670 = vmatprep.subr.mxu0 0.0
        %671 = vmatpush1.msra.mxu0 %v658
        %672 = vmatprep.subr.mxu0 0.0
        %673 = vmatpush1.msra.mxu0 %v659
        %674 = vmatprep.subr.mxu0 0.0
        %675 = vmatpush1.msra.mxu0 0.0
        %676 = vmatprep.subr.mxu0 0.0
        %677 = vmatpush1.msra.mxu0 0.0
        %678 = vmatprep.subr.mxu0 0.0
        %679 = vmatpush1.msra.mxu0 0.0
        %680 = vmatprep.subr.mxu0 0.0
        %681 = vmatpush1.msra.mxu0 0.0
        %682 = vmatprep.subr.mxu0 0.0
        %683 = vmatpush1.msra.mxu0 0.0
        %684 = vmatprep.subr.mxu0 0.0
        %685 = vmatpush1.msra.mxu0 0.0
        %686 = vmatprep.subr.mxu0 0.0
        %687 = vmatpush1.msra.mxu0 0.0
        %688 = vmatprep.subr.mxu0 0.0
        %689 = vmatpush1.msra.mxu0 0.0
        %690 = vmatprep.subr.mxu0 0.0
        %691 = vmatpush1.msra.mxu0 0.0
        %692 = vmatprep.subr.mxu0 0.0
        %693 = vmatpush1.msra.mxu0 0.0
        %694 = vmatprep.subr.mxu0 0.0
        %695 = vmatpush1.msra.mxu0 0.0
        %696 = vmatprep.subr.mxu0 0.0
        %697 = vmatpush1.msra.mxu0 0.0
        %698 = vmatprep.subr.mxu0 0.0
        %699 = vmatpush1.msra.mxu0 0.0
        %700 = vmatprep.subr.mxu0 0.0
        %701 = vmatpush1.msra.mxu0 0.0
        %702 = vmatprep.subr.mxu0 0.0
        %703 = vmatpush1.msra.mxu0 0.0
        %704 = vmatprep.subr.mxu0 0.0
        %705 = vmatpush1.msra.mxu0 0.0
        %706 = vmatprep.subr.mxu0 0.0
        %707 = vmatpush1.msra.mxu0 0.0
        %708 = vmatprep.subr.mxu0 0.0
        %709 = vmatpush1.msra.mxu0 0.0
        %710 = vmatprep.subr.mxu0 0.0
        %711 = vmatpush1.msra.mxu0 0.0
        %712 = vmatprep.subr.mxu0 0.0
        %713 = vmatpush1.msra.mxu0 0.0
        %714 = vmatprep.subr.mxu0 0.0
        %715 = vmatpush1.msra.mxu0 0.0
        %716 = vmatprep.subr.mxu0 0.0
        %717 = vmatpush1.msra.mxu0 0.0
        %718 = vmatprep.subr.mxu0 0.0
        %719 = vmatpush1.msra.mxu0 0.0
        %720 = vmatprep.subr.mxu0 0.0
        %721 = vmatpush1.msra.mxu0 0.0
        %722 = vmatprep.subr.mxu0 0.0
        %723 = vmatpush1.msra.mxu0 0.0
        %724 = vmatprep.subr.mxu0 0.0
        %725 = vmatpush1.msra.mxu0 0.0
        %726 = vmatprep.subr.mxu0 0.0
        %727 = vmatpush1.msra.mxu0 0.0
        %728 = vmatprep.subr.mxu0 0.0
        %729 = vmatpush1.msra.mxu0 0.0
        %730 = vmatprep.mubr.f32.mxu0 0.0
        %731 = vmatmul.mubr.f32.gmra.mrb[0].mxu0 %v664
        %v732 = vpop.f32.mrb[0].mxu0
        %v733 = vadd.f32 %v662, %v732
        %v734 = vpop.f32.mrb[0].mxu0
        %735 = vdwg.mxu0
        %v736 = vxor.u32 %v733, 2147483648
        %v737 = vmul.f32 %v736, 1.442695
        %v738 = vpow.pop %v737
        %v739 = vadd.f32 %v738, 1.0
        %v740 = vrcp.pop %v739
        %v741 = vmul.f32 1.0, %v740
        %v742 = vadd.f32 %v741, 1.0
        %v743 = vlaneseq
        %v744 = vshrl.u32 %v743, 7
        %v745 = vsub.s32 0, %v744
        %v746 = vrot.slane %v742, %v745
        %v747 = vmul.f32 %v389, %v746
        %v748 = vmul.f32 %v390, %v746
        %v749 = vmul.f32 %v391, %v746
        %v750 = vmul.f32 %v392, %v746
        %751 = vst [vmem:[%s384] sm:$0xff] %v747
        %752 = vst [vmem:[%s384 + $0x8] sm:$0xff] %v748
        %753 = vst [vmem:[%s384 + $0x10] sm:$0xff] %v749
        %754 = vst [vmem:[%s384 + $0x18] sm:$0xff] %v750
        %s755 = sand.u32 %s233, 1
        %s756 = scalar_lea.sflag [#allocation5], %s755
        %s757 = sand.u32 %s233, 1
        %s758 = smul.addr %s757, 32
        %s759 = scalar_lea.vmem [#allocation8], %s758
        // Predicated region
        $region61: #{tpu_custom_call.1} parent=51 // pred_check
          %p760 = pneg %p243
        $region62: #{tpu_custom_call.1} parent=51 // pred_check_branch
          %762 = sbr.rel (%p760) target = $region64
        $region63: #{tpu_custom_call.1} parent=51 // pred_region
          %s764 = ssub.s32 512, 512
          %765 = vsyncadd %s756, %s764
          %s766 = smul.addr %s33, 8
          %s767 = sadd.s32 %s34, %s766
          %s768 = smul.addr %s767, 128
          %s769 = scalar_lea.hbm %s8, %s768
          %s770 = sshll.u32 %s759, 4
          %s771 = int_to_ptr.vmem [resolvable:$true] %s770
          %776 = dma.vmem_to_hbm [thread:$0]  %s771, 512, %s769, %s756, 128, 256, 8
        $region64: #{tpu_custom_call.1} parent=51 // pred_fallthru
          _
      $region52: #{tpu_custom_call.1} parent=5 // pred_fallthru
        _
      %p777 = scmp.le.s32.totalorder 2, %s24
      // Predicated region
      $region65: #{tpu_custom_call.1} parent=5 // pred_check
        %p778 = pneg %p777
      $region66: #{tpu_custom_call.1} parent=5 // pred_check_branch
        %780 = sbr.rel (%p778) target = $region68
      $region67: #{tpu_custom_call.1} parent=5 // pred_region
        %s781 = ssub.s32 %s24, 2
        // Predicated region
        $region69: #{tpu_custom_call.1} parent=67 // pred_check
          %p782 = pneg %p249
        $region70: #{tpu_custom_call.1} parent=67 // pred_check_branch
          %784 = sbr.rel (%p782) target = $region72
        $region71: #{tpu_custom_call.1} parent=67 // pred_region
          %s785 = sand.u32 %s234, 1
          %s786 = scalar_lea.sflag [#allocation5], %s785
          %s787 = sand.u32 %s234, 1
          %s788 = smul.addr %s787, 32
          %s789 = scalar_lea.vmem [#allocation8], %s788
          %790 = dma.done %s786, 512
        $region72: #{tpu_custom_call.1} parent=67 // pred_fallthru
          _
      $region68: #{tpu_custom_call.1} parent=5 // pred_fallthru
        _
    $region6: #{tpu_custom_call.1} parent=1 // loop_footer
      %s28 = sadd.s32 1, %s24
    $region7: #{tpu_custom_call.1} parent=1 // loop_footer_branch
      %23 = sbr.rel target = $region3
    $region8: #{tpu_custom_call.1} parent=1 // loop_exit
      _
    %791 = vsyncpa [#allocation4], 1
    %s792 = scalar_lea.sflag [#allocation4], 1
    %793 = vsyncpa %s792, 1
    %794 = vsyncpa [#allocation7], 1
    %s795 = scalar_lea.sflag [#allocation7], 1
    %796 = vsyncpa %s795, 1
    %797 = vsyncpa [#allocation5], 1
    %s798 = scalar_lea.sflag [#allocation5], 1
    %799 = vsyncpa %s798, 1

</llo_original>
